<compile_context>
chip_gen: v7x
topology: tpu7x:2x2x1
jax: 0.10.0
libtpu: 0.0.40
codegen_flags: <defaults>
</compile_context>

<pallas_src>
import jax
import jax.numpy as jnp
from jax.experimental import pallas as pl
from jax.experimental.pallas import tpu as pltpu


def _round_up(x, m):
    return -(-x // m) * m


def _choose_tb(batch):
    """Batch-tile size.

    Large batches: biggest tile in {512, 256, 128} that still leaves >= 2 grid
    steps, so v7x's second TensorCore gets work and the fixed per-step
    overhead (~0.35 us) is amortized.  Tiny batches: one tile rounded up to a
    sublane multiple (8)."""
    for tb in (512, 256, 128):
        if batch >= 2 * tb:
            return tb
    if batch > 128:
        return 128
    return max(8, _round_up(batch, 8))


def _vmem_limit_bytes(tb, in_dim):
    """Scoped-VMEM request derived from the actual working set: double-buffered
    bf16 weights + f32 biases + double-buffered input/output blocks + f32
    intermediates, with 2x headroom, clamped to [8, 24] MiB (safe on v7x's
    64 MiB parts, trivial on v5e/v6e's 128 MiB)."""
    w = 2 * 2 * (in_dim * 512 + 512 * 256 + 256 * 256 + 8 * 256)   # bf16, 2 bufs
    b = 2 * 4 * (512 + 256 + 256 + 1)                              # f32 biases
    io = 2 * 4 * (tb * in_dim) + 2 * 4 * (8 * tb)                  # in/out blocks
    act = 4 * tb * (512 + 256 + 256)                               # f32 activations
    total = 2 * (w + b + io + act)
    return int(min(max(total, 8 << 20), 24 << 20))


def _critic_kernel(x_ref, w1_ref, b1_ref, w2_ref, b2_ref, w3_ref, b3_ref,
                   w4_ref, b4_ref, o_ref):
    # Layer 1: single fused matmul over the concatenated (state, action)
    # features.  bf16 operands into the MXU, f32 accumulation, f32 VPU epilogue.
    x = x_ref[...].astype(jnp.bfloat16)
    h = jnp.dot(x, w1_ref[...], preferred_element_type=jnp.float32) + b1_ref[...]
    h = jnp.maximum(h, 0.0)

    # Layer 2 + ReLU
    h = jnp.dot(h.astype(jnp.bfloat16), w2_ref[...],
                preferred_element_type=jnp.float32) + b2_ref[...]
    h = jnp.maximum(h, 0.0)

    # Layer 3 + ReLU
    h = jnp.dot(h.astype(jnp.bfloat16), w3_ref[...],
                preferred_element_type=jnp.float32) + b3_ref[...]
    h = jnp.maximum(h, 0.0)

    # 256 -> 1 head: one sublane-group MXU pass producing a lane-dense (8, TB)
    # tile directly (q[t] = sum_k w4[k] * h[t, k]; all 8 rows identical since
    # w4 is replicated).  Stored unmasked instead of TB masked 1-lane stores.
    q = jax.lax.dot_general(
        w4_ref[...], h.astype(jnp.bfloat16),
        dimension_numbers=(((1,), (1,)), ((), ())),
        preferred_element_type=jnp.float32) + b4_ref[...]
    o_ref[...] = q.astype(o_ref.dtype)


def critic_forward(state, action, kparams):
    """state: (B, S) f32, action: (B, A) f32 -> q: (B, 1) f32."""
    (w1, b1), (w2, b2), (w3, b3), (w4_rep, b4) = kparams
    B = state.shape[0]
    # Concat in the wrapper (~64 B/row): lets layer 1 run as ONE MXU matmul.
    x = jnp.concatenate([state, action], axis=1)
    D = x.shape[1]

    TB = _choose_tb(B)
    padded_B = _round_up(B, TB)
    if padded_B != B:
        x = jnp.pad(x, ((0, padded_B - B), (0, 0)))

    # Weights/biases: same block every grid step -> DMA'd once, VMEM-resident.
    resident = lambda arr: pl.BlockSpec(arr.shape, lambda i: (0, 0))

    out = pl.pallas_call(
        _critic_kernel,
        out_shape=jax.ShapeDtypeStruct((8, padded_B), jnp.float32),
        grid=(padded_B // TB,),
        in_specs=[pl.BlockSpec((TB, D), lambda i: (i, 0)),
                  resident(w1), resident(b1),
                  resident(w2), resident(b2),
                  resident(w3), resident(b3),
                  resident(w4_rep), resident(b4)],
        out_specs=pl.BlockSpec((8, TB), lambda i: (0, i)),
        compiler_params=pltpu.CompilerParams(
            dimension_semantics=("parallel",),        # shards tiles on v7x's 2 TCs
            vmem_limit_bytes=_vmem_limit_bytes(TB, D),
        ),
    )(x, w1, b1, w2, b2, w3, b3, w4_rep, b4)
    # Row 0 of the lane-dense slab holds q for every batch row; drop padding.
    return out[0, :B, None]


def init_params(key, state_dim, action_dim):
    """f32 master weights, nn.Linear default init U(-1/sqrt(fan_in), +1/sqrt(fan_in))."""
    dims = [(state_dim + action_dim, 512), (512, 256), (256, 256), (256, 1)]
    params = []
    for fan_in, fan_out in dims:
        key, kw, kb = jax.random.split(key, 3)
        bound = 1.0 / jnp.sqrt(float(fan_in))
        w = jax.random.uniform(kw, (fan_in, fan_out), jnp.float32, -bound, bound)
        b = jax.random.uniform(kb, (1, fan_out), jnp.float32, -bound, bound)
        params.append((w, b))
    return params


def prepare_kernel_params(params):
    """bf16 weights feeding the MXU (accumulation stays f32 in-kernel), f32
    biases.  The 256->1 head weight is replicated to an (8, 256) block so the
    head matmul emits a lane-dense (8, TB) tile directly."""
    (w1, b1), (w2, b2), (w3, b3), (w4, b4) = params
    w4_rep = jnp.broadcast_to(w4.reshape(1, -1), (8, w4.shape[0])).astype(jnp.bfloat16)
    return ((w1.astype(jnp.bfloat16), b1),
            (w2.astype(jnp.bfloat16), b2),
            (w3.astype(jnp.bfloat16), b3),
            (w4_rep, b4))


def critic_reference(state, action, kparams):
    """Pure-JAX reference using the identical mixed-precision recipe."""
    (w1, b1), (w2, b2), (w3, b3), (w4_rep, b4) = kparams
    x = jnp.concatenate([state, action], axis=1).astype(jnp.bfloat16)
    h = jnp.dot(x, w1, preferred_element_type=jnp.float32) + b1
    h = jnp.maximum(h, 0.0)
    h = jnp.dot(h.astype(jnp.bfloat16), w2, preferred_element_type=jnp.float32) + b2
    h = jnp.maximum(h, 0.0)
    h = jnp.dot(h.astype(jnp.bfloat16), w3, preferred_element_type=jnp.float32) + b3
    h = jnp.maximum(h, 0.0)
    return jnp.dot(h.astype(jnp.bfloat16), w4_rep[0:1].T,
                   preferred_element_type=jnp.float32) + b4


if __name__ == "__main__":
    # TODO(synk): checkpoint save/load (checkpoints_dir / .pth path) in the
    # PyTorch module is file I/O, not part of the forward pass; not translated.
    key = jax.random.PRNGKey(0)
    B, S, A = 8, 12, 4                       # state_action_shape = 16
    key, ks, ka, kp = jax.random.split(key, 4)
    state = jax.random.normal(ks, (B, S), jnp.float32)
    action = jax.random.normal(ka, (B, A), jnp.float32)

    params = init_params(kp, S, A)           # f32 master weights
    kparams = prepare_kernel_params(params)

    q = critic_forward(state, action, kparams)
    jax.block_until_ready(q)
    assert q.shape == (B, 1)

    # Apples-to-apples check: same bf16-weights / f32-accumulation recipe.
    q_ref = critic_reference(state, action, kparams)
    assert jnp.allclose(q, q_ref, atol=5e-3, rtol=5e-3), \
        float(jnp.max(jnp.abs(q - q_ref)))

    # Loose sanity check against the full-f32 PyTorch-semantics forward.
    xf = jnp.concatenate([state, action], axis=1)
    (w1, b1), (w2, b2), (w3, b3), (w4, b4) = params
    hf = jnp.maximum(xf @ w1 + b1, 0.0)
    hf = jnp.maximum(hf @ w2 + b2, 0.0)
    hf = jnp.maximum(hf @ w3 + b3, 0.0)
    q_f32 = hf @ w4 + b4
    assert float(jnp.max(jnp.abs(q - q_f32))) < 1e-1

    print("KERNEL_OK")
</pallas_src>

<mosaic_0001>
module attributes {stable_mosaic.version = 11 : i64} {
  func.func @_critic_kernel(%arg0: i32, %arg1: memref<8x16xf32, #tpu.memory_space<vmem>>, %arg2: memref<16x512xbf16, #tpu.memory_space<vmem>>, %arg3: memref<1x512xf32, #tpu.memory_space<vmem>>, %arg4: memref<512x256xbf16, #tpu.memory_space<vmem>>, %arg5: memref<1x256xf32, #tpu.memory_space<vmem>>, %arg6: memref<256x256xbf16, #tpu.memory_space<vmem>>, %arg7: memref<1x256xf32, #tpu.memory_space<vmem>>, %arg8: memref<8x256xbf16, #tpu.memory_space<vmem>>, %arg9: memref<1x1xf32, #tpu.memory_space<vmem>>, %arg10: memref<8x8xf32, #tpu.memory_space<vmem>>) attributes {dimension_semantics = [#tpu.dimension_semantics<parallel>], iteration_bounds = array<i64: 1>, scalar_prefetch = 0 : i64, scratch_operands = 0 : i64, tpu.core_type = #tpu.core_type<tc>, window_params = [{transform_indices = @transform_0, window_bounds = array<i64: 8, 16>}, {pipeline_mode = #tpu.pipeline_mode<synchronous>, transform_indices = @transform_1, window_bounds = array<i64: 16, 512>}, {pipeline_mode = #tpu.pipeline_mode<synchronous>, transform_indices = @transform_2, window_bounds = array<i64: 1, 512>}, {pipeline_mode = #tpu.pipeline_mode<synchronous>, transform_indices = @transform_3, window_bounds = array<i64: 512, 256>}, {pipeline_mode = #tpu.pipeline_mode<synchronous>, transform_indices = @transform_4, window_bounds = array<i64: 1, 256>}, {pipeline_mode = #tpu.pipeline_mode<synchronous>, transform_indices = @transform_5, window_bounds = array<i64: 256, 256>}, {pipeline_mode = #tpu.pipeline_mode<synchronous>, transform_indices = @transform_6, window_bounds = array<i64: 1, 256>}, {pipeline_mode = #tpu.pipeline_mode<synchronous>, transform_indices = @transform_7, window_bounds = array<i64: 8, 256>}, {pipeline_mode = #tpu.pipeline_mode<synchronous>, transform_indices = @transform_8, window_bounds = array<i64: 1, 1>}, {transform_indices = @transform_9, window_bounds = array<i64: 8, 8>}]} {
    %c0 = arith.constant 0 : index
    %c0_0 = arith.constant 0 : index
    %0 = vector.load %arg1[%c0, %c0_0] : memref<8x16xf32, #tpu.memory_space<vmem>>, vector<8x16xf32>
    %1 = arith.truncf %0 : vector<8x16xf32> to vector<8x16xbf16>
    %c0_1 = arith.constant 0 : index
    %c0_2 = arith.constant 0 : index
    %2 = vector.load %arg2[%c0_1, %c0_2] : memref<16x512xbf16, #tpu.memory_space<vmem>>, vector<16x512xbf16>
    %cst = arith.constant dense<0.000000e+00> : vector<8x512xf32>
    %3 = tpu.matmul %1, %2, %cst {dimension_numbers = #tpu.dot_dimension_numbers<[1], [0], [0], [1], [0, 0, 1, 1], [], []>} : vector<8x16xbf16>, vector<16x512xbf16>, vector<8x512xf32> -> vector<8x512xf32>
    %c0_3 = arith.constant 0 : index
    %c0_4 = arith.constant 0 : index
    %4 = vector.load %arg3[%c0_3, %c0_4] : memref<1x512xf32, #tpu.memory_space<vmem>>, vector<1x512xf32>
    %5 = vector.broadcast %4 : vector<1x512xf32> to vector<8x512xf32>
    %6 = arith.addf %3, %5 : vector<8x512xf32>
    %cst_5 = arith.constant 0.000000e+00 : f32
    %7 = vector.broadcast %cst_5 : f32 to vector<8x512xf32>
    %8 = arith.maximumf %6, %7 : vector<8x512xf32>
    %9 = arith.truncf %8 : vector<8x512xf32> to vector<8x512xbf16>
    %c0_6 = arith.constant 0 : index
    %c0_7 = arith.constant 0 : index
    %10 = vector.load %arg4[%c0_6, %c0_7] : memref<512x256xbf16, #tpu.memory_space<vmem>>, vector<512x256xbf16>
    %cst_8 = arith.constant dense<0.000000e+00> : vector<8x256xf32>
    %11 = tpu.matmul %9, %10, %cst_8 {dimension_numbers = #tpu.dot_dimension_numbers<[1], [0], [0], [1], [0, 0, 1, 1], [], []>} : vector<8x512xbf16>, vector<512x256xbf16>, vector<8x256xf32> -> vector<8x256xf32>
    %c0_9 = arith.constant 0 : index
    %c0_10 = arith.constant 0 : index
    %12 = vector.load %arg5[%c0_9, %c0_10] : memref<1x256xf32, #tpu.memory_space<vmem>>, vector<1x256xf32>
    %13 = vector.broadcast %12 : vector<1x256xf32> to vector<8x256xf32>
    %14 = arith.addf %11, %13 : vector<8x256xf32>
    %cst_11 = arith.constant 0.000000e+00 : f32
    %15 = vector.broadcast %cst_11 : f32 to vector<8x256xf32>
    %16 = arith.maximumf %14, %15 : vector<8x256xf32>
    %17 = arith.truncf %16 : vector<8x256xf32> to vector<8x256xbf16>
    %c0_12 = arith.constant 0 : index
    %c0_13 = arith.constant 0 : index
    %18 = vector.load %arg6[%c0_12, %c0_13] : memref<256x256xbf16, #tpu.memory_space<vmem>>, vector<256x256xbf16>
    %cst_14 = arith.constant dense<0.000000e+00> : vector<8x256xf32>
    %19 = tpu.matmul %17, %18, %cst_14 {dimension_numbers = #tpu.dot_dimension_numbers<[1], [0], [0], [1], [0, 0, 1, 1], [], []>} : vector<8x256xbf16>, vector<256x256xbf16>, vector<8x256xf32> -> vector<8x256xf32>
    %c0_15 = arith.constant 0 : index
    %c0_16 = arith.constant 0 : index
    %20 = vector.load %arg7[%c0_15, %c0_16] : memref<1x256xf32, #tpu.memory_space<vmem>>, vector<1x256xf32>
    %21 = vector.broadcast %20 : vector<1x256xf32> to vector<8x256xf32>
    %22 = arith.addf %19, %21 : vector<8x256xf32>
    %cst_17 = arith.constant 0.000000e+00 : f32
    %23 = vector.broadcast %cst_17 : f32 to vector<8x256xf32>
    %24 = arith.maximumf %22, %23 : vector<8x256xf32>
    %c0_18 = arith.constant 0 : index
    %c0_19 = arith.constant 0 : index
    %25 = vector.load %arg8[%c0_18, %c0_19] : memref<8x256xbf16, #tpu.memory_space<vmem>>, vector<8x256xbf16>
    %26 = arith.truncf %24 : vector<8x256xf32> to vector<8x256xbf16>
    %cst_20 = arith.constant dense<0.000000e+00> : vector<8x8xf32>
    %27 = tpu.matmul %25, %26, %cst_20 {dimension_numbers = #tpu.dot_dimension_numbers<[1], [1], [0], [0], [0, 0, 1, 0], [], []>} : vector<8x256xbf16>, vector<8x256xbf16>, vector<8x8xf32> -> vector<8x8xf32>
    %c0_21 = arith.constant 0 : index
    %c0_22 = arith.constant 0 : index
    %28 = vector.load %arg9[%c0_21, %c0_22] : memref<1x1xf32, #tpu.memory_space<vmem>>, vector<1x1xf32>
    %29 = vector.broadcast %28 : vector<1x1xf32> to vector<8x8xf32>
    %30 = arith.addf %27, %29 : vector<8x8xf32>
    %c0_23 = arith.constant 0 : index
    %c0_24 = arith.constant 0 : index
    %31 = vector.load %arg10[%c0_23, %c0_24] : memref<8x8xf32, #tpu.memory_space<vmem>>, vector<8x8xf32>
    tpu.vector_store %arg10[%c0_23, %c0_24], %30 {strides = array<i32>} : memref<8x8xf32, #tpu.memory_space<vmem>>, vector<8x8xf32>,
    return
  }
  func.func @transform_0(%arg0: i32) -> (i32, i32) {
    %c0_i32 = arith.constant 0 : i32
    %c0_i32_0 = arith.constant 0 : i32
    return %arg0, %c0_i32 : i32, i32
  }
  func.func @transform_1(%arg0: i32) -> (i32, i32) {
    %c0_i32 = arith.constant 0 : i32
    %c0_i32_0 = arith.constant 0 : i32
    %c0_i32_1 = arith.constant 0 : i32
    return %c0_i32, %c0_i32_0 : i32, i32
  }
  func.func @transform_2(%arg0: i32) -> (i32, i32) {
    %c0_i32 = arith.constant 0 : i32
    %c0_i32_0 = arith.constant 0 : i32
    %c0_i32_1 = arith.constant 0 : i32
    return %c0_i32, %c0_i32_0 : i32, i32
  }
  func.func @transform_3(%arg0: i32) -> (i32, i32) {
    %c0_i32 = arith.constant 0 : i32
    %c0_i32_0 = arith.constant 0 : i32
    %c0_i32_1 = arith.constant 0 : i32
    return %c0_i32, %c0_i32_0 : i32, i32
  }
  func.func @transform_4(%arg0: i32) -> (i32, i32) {
    %c0_i32 = arith.constant 0 : i32
    %c0_i32_0 = arith.constant 0 : i32
    %c0_i32_1 = arith.constant 0 : i32
    return %c0_i32, %c0_i32_0 : i32, i32
  }
  func.func @transform_5(%arg0: i32) -> (i32, i32) {
    %c0_i32 = arith.constant 0 : i32
    %c0_i32_0 = arith.constant 0 : i32
    %c0_i32_1 = arith.constant 0 : i32
    return %c0_i32, %c0_i32_0 : i32, i32
  }
  func.func @transform_6(%arg0: i32) -> (i32, i32) {
    %c0_i32 = arith.constant 0 : i32
    %c0_i32_0 = arith.constant 0 : i32
    %c0_i32_1 = arith.constant 0 : i32
    return %c0_i32, %c0_i32_0 : i32, i32
  }
  func.func @transform_7(%arg0: i32) -> (i32, i32) {
    %c0_i32 = arith.constant 0 : i32
    %c0_i32_0 = arith.constant 0 : i32
    %c0_i32_1 = arith.constant 0 : i32
    return %c0_i32, %c0_i32_0 : i32, i32
  }
  func.func @transform_8(%arg0: i32) -> (i32, i32) {
    %c0_i32 = arith.constant 0 : i32
    %c0_i32_0 = arith.constant 0 : i32
    %c0_i32_1 = arith.constant 0 : i32
    return %c0_i32, %c0_i32_0 : i32, i32
  }
  func.func @transform_9(%arg0: i32) -> (i32, i32) {
    %c0_i32 = arith.constant 0 : i32
    %c0_i32_0 = arith.constant 0 : i32
    return %c0_i32, %arg0 : i32, i32
  }
}

</mosaic_0001>

<llo_original>
// kernel: tpu_custom_call.1
$region0: #{tpu_custom_call.1}
  #allocation0 [shape = 'u32[]', space=smem, size = 0x4, offset = 0x4, fixed_abs, tag = 'smem constant byte address 0x4 - core index']
  #allocation1 [shape = 'u32[144,128]{1,0:T(1,128)}', space=vmem, size = 0x12000, scoped, tag = 'internal scratch']
  #allocation2 [shape = 'f32[1,1]{1,0:T(1,128)S(1)}', space=vmem, size = 0x200, scoped, tag = 'scoped memory for tpu_custom_call.1']
  %s0 = inlined_call_operand.hbm [shape: f32[8,16], index: 0, kind: input, shape index: {}]
  %s1 = inlined_call_operand.hbm [shape: bf16[16,512], index: 1, kind: input, shape index: {}]
  %s2 = inlined_call_operand.vmem [shape: f32[1,512], index: 2, kind: input, shape index: {}]
  %s3 = inlined_call_operand.hbm [shape: bf16[512,256], index: 3, kind: input, shape index: {}]
  %s4 = inlined_call_operand.vmem [shape: f32[1,256], index: 4, kind: input, shape index: {}]
  %s5 = inlined_call_operand.hbm [shape: bf16[256,256], index: 5, kind: input, shape index: {}]
  %s6 = inlined_call_operand.vmem [shape: f32[1,256], index: 6, kind: input, shape index: {}]
  %s7 = inlined_call_operand.vmem [shape: bf16[8,256], index: 7, kind: input, shape index: {}]
  %s8 = inlined_call_operand.<no memory space> [shape: f32[1,1], index: 8, kind: input, shape index: {}]
  %s9 = inlined_call_operand.hbm [shape: f32[8,8], index: 9, kind: output, shape index: {}]
  %s10 = sld [smem:[#allocation0]]
  $region62: #{tpu_custom_call.1} parent=0
    _
  %s12 = ssub.s32 1, %s10
  %s13 = scalar_select 0, %s12, %s10
  %v14 = vstv %s8
  %15 = vst [vmem:[#allocation2] sm:$0x1] %v14
  $region1: #{tpu_custom_call.1} parent=0
    #allocation3 [shape = 'u8[4096]{0}', space=vmem, size = 0x1000, scoped, tag = 'input window, operand 0, single buffered']
    #allocation4 [shape = 's32[1]{0}', space=sflag, size = 0x4, scoped, tag = 'scoped memory for tpu_custom_call.1']
    #allocation5 [shape = 's32[1]{0}', space=sflag, size = 0x4, scoped, tag = 'scoped memory for tpu_custom_call.1']
    #allocation6 [shape = 'u8[16384]{0}', space=vmem, size = 0x4000, scoped, tag = 'input window, operand 1, single buffered']
    #allocation7 [shape = 's32[1]{0}', space=sflag, size = 0x4, scoped, tag = 'scoped memory for tpu_custom_call.1']
    #allocation8 [shape = 'u8[262144]{0}', space=vmem, size = 0x40000, scoped, tag = 'input window, operand 3, single buffered']
    #allocation9 [shape = 'u8[131072]{0}', space=vmem, size = 0x20000, scoped, tag = 'input window, operand 5, single buffered']
    #allocation10 [shape = 's32[1]{0}', space=sflag, size = 0x4, scoped, tag = 'scoped memory for tpu_custom_call.1']
    #allocation11 [shape = 'u8[4096]{0}', space=vmem, size = 0x1000, scoped, tag = 'output window, operand 0, single buffered']
    %16 = vsyncpa [#allocation4], 0
    %17 = vsyncpa [#allocation7], 0
    %18 = vsyncpa [#allocation10], 0
    %19 = vsyncpa [#allocation5], 0
    // Predicated region
    $region2: #{tpu_custom_call.1} parent=1 // pred_check
      _
    $region3: #{tpu_custom_call.1} parent=1 // pred_check_branch
      %21 = sbr.rel (0) target = $region5
    $region4: #{tpu_custom_call.1} parent=1 // pred_region
      %s23 = ssub.s32 128, 128
      %24 = vsyncadd [#allocation4], %s23
      %s26 = sshll.u32 [#allocation3], 4
      %s27 = int_to_ptr.vmem [resolvable:$true] %s26
      %29 = dma.hbm_to_vmem [thread:$0]  %s0, 128, %s27, [#allocation4]
    $region5: #{tpu_custom_call.1} parent=1 // pred_fallthru
      _
    // Predicated region
    $region6: #{tpu_custom_call.1} parent=1 // pred_check
      _
    $region7: #{tpu_custom_call.1} parent=1 // pred_check_branch
      %31 = sbr.rel (0) target = $region9
    $region8: #{tpu_custom_call.1} parent=1 // pred_region
      %s33 = ssub.s32 512, 512
      %34 = vsyncadd [#allocation7], %s33
      %s35 = sshll.u32 [#allocation6], 4
      %s36 = int_to_ptr.vmem [resolvable:$true] %s35
      %41 = dma.hbm_to_vmem [thread:$0]  %s1, 512, %s36, [#allocation7], 256, 256, 16
    $region9: #{tpu_custom_call.1} parent=1 // pred_fallthru
      _
    // Predicated region
    $region10: #{tpu_custom_call.1} parent=1 // pred_check
      _
    $region11: #{tpu_custom_call.1} parent=1 // pred_check_branch
      %43 = sbr.rel (0) target = $region13
    $region12: #{tpu_custom_call.1} parent=1 // pred_region
      _
    $region13: #{tpu_custom_call.1} parent=1 // pred_fallthru
      _
    // Predicated region
    $region14: #{tpu_custom_call.1} parent=1 // pred_check
      _
    $region15: #{tpu_custom_call.1} parent=1 // pred_check_branch
      %45 = sbr.rel (0) target = $region17
    $region16: #{tpu_custom_call.1} parent=1 // pred_region
      %s47 = ssub.s32 8192, 8192
      %48 = vsyncadd [#allocation7], %s47
      %s49 = sshll.u32 [#allocation8], 4
      %s50 = int_to_ptr.vmem [resolvable:$true] %s49
      %55 = dma.hbm_to_vmem [thread:$0]  %s3, 8192, %s50, [#allocation7], 128, 128, 8
    $region17: #{tpu_custom_call.1} parent=1 // pred_fallthru
      _
    // Predicated region
    $region18: #{tpu_custom_call.1} parent=1 // pred_check
      _
    $region19: #{tpu_custom_call.1} parent=1 // pred_check_branch
      %57 = sbr.rel (0) target = $region21
    $region20: #{tpu_custom_call.1} parent=1 // pred_region
      _
    $region21: #{tpu_custom_call.1} parent=1 // pred_fallthru
      _
    // Predicated region
    $region22: #{tpu_custom_call.1} parent=1 // pred_check
      _
    $region23: #{tpu_custom_call.1} parent=1 // pred_check_branch
      %59 = sbr.rel (0) target = $region25
    $region24: #{tpu_custom_call.1} parent=1 // pred_region
      %s61 = ssub.s32 4096, 4096
      %62 = vsyncadd [#allocation10], %s61
      %s63 = sshll.u32 [#allocation9], 4
      %s64 = int_to_ptr.vmem [resolvable:$true] %s63
      %69 = dma.hbm_to_vmem [thread:$0]  %s5, 4096, %s64, [#allocation10], 128, 128, 8
    $region25: #{tpu_custom_call.1} parent=1 // pred_fallthru
      _
    // Predicated region
    $region26: #{tpu_custom_call.1} parent=1 // pred_check
      _
    $region27: #{tpu_custom_call.1} parent=1 // pred_check_branch
      %71 = sbr.rel (0) target = $region29
    $region28: #{tpu_custom_call.1} parent=1 // pred_region
      _
    $region29: #{tpu_custom_call.1} parent=1 // pred_fallthru
      _
    // Predicated region
    $region30: #{tpu_custom_call.1} parent=1 // pred_check
      _
    $region31: #{tpu_custom_call.1} parent=1 // pred_check_branch
      %73 = sbr.rel (0) target = $region33
    $region32: #{tpu_custom_call.1} parent=1 // pred_region
      _
    $region33: #{tpu_custom_call.1} parent=1 // pred_fallthru
      _
    // Predicated region
    $region34: #{tpu_custom_call.1} parent=1 // pred_check
      _
    $region35: #{tpu_custom_call.1} parent=1 // pred_check_branch
      %75 = sbr.rel (0) target = $region37
    $region36: #{tpu_custom_call.1} parent=1 // pred_region
      _
    $region37: #{tpu_custom_call.1} parent=1 // pred_fallthru
      _
    // Predicated region
    $region38: #{tpu_custom_call.1} parent=1 // pred_check
      _
    $region39: #{tpu_custom_call.1} parent=1 // pred_check_branch
      %77 = sbr.rel (0) target = $region41
    $region40: #{tpu_custom_call.1} parent=1 // pred_region
      %78 = dma.done [#allocation4], 128
    $region41: #{tpu_custom_call.1} parent=1 // pred_fallthru
      _
    // Predicated region
    $region42: #{tpu_custom_call.1} parent=1 // pred_check
      _
    $region43: #{tpu_custom_call.1} parent=1 // pred_check_branch
      %80 = sbr.rel (0) target = $region45
    $region44: #{tpu_custom_call.1} parent=1 // pred_region
      %81 = dma.done [#allocation7], 512
    $region45: #{tpu_custom_call.1} parent=1 // pred_fallthru
      _
    // Predicated region
    $region46: #{tpu_custom_call.1} parent=1 // pred_check
      _
    $region47: #{tpu_custom_call.1} parent=1 // pred_check_branch
      %83 = sbr.rel (0) target = $region49
    $region48: #{tpu_custom_call.1} parent=1 // pred_region
      %84 = dma.done [#allocation7], 8192
    $region49: #{tpu_custom_call.1} parent=1 // pred_fallthru
      _
    // Predicated region
    $region50: #{tpu_custom_call.1} parent=1 // pred_check
      _
    $region51: #{tpu_custom_call.1} parent=1 // pred_check_branch
      %86 = sbr.rel (0) target = $region53
    $region52: #{tpu_custom_call.1} parent=1 // pred_region
      %87 = dma.done [#allocation10], 4096
    $region53: #{tpu_custom_call.1} parent=1 // pred_fallthru
      _
    %v89 = vld [vmem:[#allocation3] sm:$0xff]
    %v90 = vpack.c.bf16 %v89, %v89
    %v91 = vld [vmem:[#allocation6] sm:$0xff]
    %v92 = vld [vmem:[#allocation6 + $0x8] sm:$0xff]
    %v93 = vld [vmem:[#allocation6 + $0x10] sm:$0xff]
    %v94 = vld [vmem:[#allocation6 + $0x18] sm:$0xff]
    %v95 = vld [vmem:[%s2] sm:$0xf]
    %v97 = vlaneseq
    %v98 = vshrl.u32 %v97, 7
    %v99 = vsub.s32 0, %v98
    %v100 = vrot.slane %v95, %v99
    %v101 = vlaneseq
    %v102 = vshrl.u32 %v101, 7
    %v103 = vsub.s32 1, %v102
    %v104 = vrot.slane %v95, %v103
    %v105 = vlaneseq
    %v106 = vshrl.u32 %v105, 7
    %v107 = vsub.s32 2, %v106
    %v108 = vrot.slane %v95, %v107
    %v109 = vlaneseq
    %v110 = vshrl.u32 %v109, 7
    %v111 = vsub.s32 3, %v110
    %v112 = vrot.slane %v95, %v111
    %v121 = vunpack.c.l.b16 %v91
    %v122 = vunpack.c.h.b16 %v91
    %v123 = vunpack.c.l.b16 %v92
    %v124 = vunpack.c.h.b16 %v92
    %v125 = vunpack.c.l.b16 %v93
    %v126 = vunpack.c.h.b16 %v93
    %v127 = vunpack.c.l.b16 %v94
    %v128 = vunpack.c.h.b16 %v94
    %v129 = vpack.c.b16 %v125, %v121
    %v130 = vpack.c.b16 %v126, %v122
    %v131 = vpack.c.b16 %v127, %v123
    %v132 = vpack.c.b16 %v128, %v124
    %vm137 = vcmask 130048
    %v139 = vsel %vm137, %v90, 0
    %141 = vmatprep.subr.bf16.mxu0 %v130
    %142 = vmatpush1.bf16.msra.mxu0 %v129
    %143 = vmatprep.subr.bf16.mxu0 0
    %144 = vmatpush1.bf16.msra.mxu0 0
    %145 = vmatprep.subr.bf16.mxu0 0
    %146 = vmatpush1.bf16.msra.mxu0 0
    %147 = vmatprep.subr.bf16.mxu0 0
    %148 = vmatpush1.bf16.msra.mxu0 0
    %149 = vmatprep.subr.bf16.mxu0 0
    %150 = vmatpush1.bf16.msra.mxu0 0
    %151 = vmatprep.subr.bf16.mxu0 0
    %152 = vmatpush1.bf16.msra.mxu0 0
    %153 = vmatprep.subr.bf16.mxu0 0
    %154 = vmatpush1.bf16.msra.mxu0 0
    %155 = vmatprep.subr.bf16.mxu0 0
    %156 = vmatpush1.bf16.msra.mxu0 0
    %157 = vmatprep.subr.bf16.mxu0 0
    %158 = vmatpush1.bf16.msra.mxu0 0
    %159 = vmatprep.subr.bf16.mxu0 0
    %160 = vmatpush1.bf16.msra.mxu0 0
    %161 = vmatprep.subr.bf16.mxu0 0
    %162 = vmatpush1.bf16.msra.mxu0 0
    %163 = vmatprep.subr.bf16.mxu0 0
    %164 = vmatpush1.bf16.msra.mxu0 0
    %165 = vmatprep.subr.bf16.mxu0 0
    %166 = vmatpush1.bf16.msra.mxu0 0
    %167 = vmatprep.subr.bf16.mxu0 0
    %168 = vmatpush1.bf16.msra.mxu0 0
    %169 = vmatprep.subr.bf16.mxu0 0
    %170 = vmatpush1.bf16.msra.mxu0 0
    %171 = vmatprep.subr.bf16.mxu0 0
    %172 = vmatpush1.bf16.msra.mxu0 0
    %173 = vmatprep.mubr.bf16.mxu0 0
    %174 = vmatmul.mubr.bf16.gmra.mrb[0].mxu0 %v139
    %v175 = vpop.f32.mrb[0].mxu0
    %v176 = vadd.f32 %v100, %v175
    %v177 = vpop.f32.mrb[0].mxu0
    %v178 = vadd.f32 %v104, %v177
    %v179 = vpop.f32.mrb[0].mxu0
    %v180 = vpop.f32.mrb[0].mxu0
    %181 = vdwg.mxu0
    %182 = vmatprep.subr.bf16.mxu0 %v132
    %183 = vmatpush1.bf16.msra.mxu0 %v131
    %184 = vmatprep.subr.bf16.mxu0 0
    %185 = vmatpush1.bf16.msra.mxu0 0
    %186 = vmatprep.subr.bf16.mxu0 0
    %187 = vmatpush1.bf16.msra.mxu0 0
    %188 = vmatprep.subr.bf16.mxu0 0
    %189 = vmatpush1.bf16.msra.mxu0 0
    %190 = vmatprep.subr.bf16.mxu0 0
    %191 = vmatpush1.bf16.msra.mxu0 0
    %192 = vmatprep.subr.bf16.mxu0 0
    %193 = vmatpush1.bf16.msra.mxu0 0
    %194 = vmatprep.subr.bf16.mxu0 0
    %195 = vmatpush1.bf16.msra.mxu0 0
    %196 = vmatprep.subr.bf16.mxu0 0
    %197 = vmatpush1.bf16.msra.mxu0 0
    %198 = vmatprep.subr.bf16.mxu0 0
    %199 = vmatpush1.bf16.msra.mxu0 0
    %200 = vmatprep.subr.bf16.mxu0 0
    %201 = vmatpush1.bf16.msra.mxu0 0
    %202 = vmatprep.subr.bf16.mxu0 0
    %203 = vmatpush1.bf16.msra.mxu0 0
    %204 = vmatprep.subr.bf16.mxu0 0
    %205 = vmatpush1.bf16.msra.mxu0 0
    %206 = vmatprep.subr.bf16.mxu0 0
    %207 = vmatpush1.bf16.msra.mxu0 0
    %208 = vmatprep.subr.bf16.mxu0 0
    %209 = vmatpush1.bf16.msra.mxu0 0
    %210 = vmatprep.subr.bf16.mxu0 0
    %211 = vmatpush1.bf16.msra.mxu0 0
    %212 = vmatprep.subr.bf16.mxu0 0
    %213 = vmatpush1.bf16.msra.mxu0 0
    %214 = vmatprep.mubr.bf16.mxu0 0
    %215 = vmatmul.mubr.bf16.gmra.mrb[0].mxu0 %v139
    %v216 = vpop.f32.mrb[0].mxu0
    %v217 = vadd.f32 %v108, %v216
    %v218 = vpop.f32.mrb[0].mxu0
    %v219 = vadd.f32 %v112, %v218
    %v220 = vpop.f32.mrb[0].mxu0
    %v221 = vpop.f32.mrb[0].mxu0
    %222 = vdwg.mxu0
    %v223 = vmax.f32 %v176, 0.0
    %v224 = vmax.f32 %v178, 0.0
    %v225 = vmax.f32 %v217, 0.0
    %v226 = vmax.f32 %v219, 0.0
    %v227 = vpack.c.bf16 %v223, %v223
    %v228 = vpack.c.bf16 %v224, %v224
    %v229 = vpack.c.bf16 %v225, %v225
    %v230 = vpack.c.bf16 %v226, %v226
    %v231 = vld [vmem:[#allocation8] sm:$0xff]
    %v232 = vld [vmem:[#allocation8 + $0x8] sm:$0xff]
    %v233 = vld [vmem:[#allocation8 + $0x10] sm:$0xff]
    %v234 = vld [vmem:[#allocation8 + $0x18] sm:$0xff]
    %v235 = vld [vmem:[#allocation8 + $0x20] sm:$0xff]
    %v236 = vld [vmem:[#allocation8 + $0x28] sm:$0xff]
    %v237 = vld [vmem:[#allocation8 + $0x30] sm:$0xff]
    %v238 = vld [vmem:[#allocation8 + $0x38] sm:$0xff]
    %v239 = vld [vmem:[#allocation8 + $0x40] sm:$0xff]
    %v240 = vld [vmem:[#allocation8 + $0x48] sm:$0xff]
    %v241 = vld [vmem:[#allocation8 + $0x50] sm:$0xff]
    %v242 = vld [vmem:[#allocation8 + $0x58] sm:$0xff]
    %v243 = vld [vmem:[#allocation8 + $0x60] sm:$0xff]
    %v244 = vld [vmem:[#allocation8 + $0x68] sm:$0xff]
    %v245 = vld [vmem:[#allocation8 + $0x70] sm:$0xff]
    %v246 = vld [vmem:[#allocation8 + $0x78] sm:$0xff]
    %v247 = vld [vmem:[#allocation8 + $0x80] sm:$0xff]
    %v248 = vld [vmem:[#allocation8 + $0x88] sm:$0xff]
    %v249 = vld [vmem:[#allocation8 + $0x90] sm:$0xff]
    %v250 = vld [vmem:[#allocation8 + $0x98] sm:$0xff]
    %v251 = vld [vmem:[#allocation8 + $0xa0] sm:$0xff]
    %v252 = vld [vmem:[#allocation8 + $0xa8] sm:$0xff]
    %v253 = vld [vmem:[#allocation8 + $0xb0] sm:$0xff]
    %v254 = vld [vmem:[#allocation8 + $0xb8] sm:$0xff]
    %v255 = vld [vmem:[#allocation8 + $0xc0] sm:$0xff]
    %v256 = vld [vmem:[#allocation8 + $0xc8] sm:$0xff]
    %v257 = vld [vmem:[#allocation8 + $0xd0] sm:$0xff]
    %v258 = vld [vmem:[#allocation8 + $0xd8] sm:$0xff]
    %v259 = vld [vmem:[#allocation8 + $0xe0] sm:$0xff]
    %v260 = vld [vmem:[#allocation8 + $0xe8] sm:$0xff]
    %v261 = vld [vmem:[#allocation8 + $0xf0] sm:$0xff]
    %v262 = vld [vmem:[#allocation8 + $0xf8] sm:$0xff]
    %v263 = vld [vmem:[#allocation8 + $0x100] sm:$0xff]
    %v264 = vld [vmem:[#allocation8 + $0x108] sm:$0xff]
    %v265 = vld [vmem:[#allocation8 + $0x110] sm:$0xff]
    %v266 = vld [vmem:[#allocation8 + $0x118] sm:$0xff]
    %v267 = vld [vmem:[#allocation8 + $0x120] sm:$0xff]
    %v268 = vld [vmem:[#allocation8 + $0x128] sm:$0xff]
    %v269 = vld [vmem:[#allocation8 + $0x130] sm:$0xff]
    %v270 = vld [vmem:[#allocation8 + $0x138] sm:$0xff]
    %v271 = vld [vmem:[#allocation8 + $0x140] sm:$0xff]
    %v272 = vld [vmem:[#allocation8 + $0x148] sm:$0xff]
    %v273 = vld [vmem:[#allocation8 + $0x150] sm:$0xff]
    %v274 = vld [vmem:[#allocation8 + $0x158] sm:$0xff]
    %v275 = vld [vmem:[#allocation8 + $0x160] sm:$0xff]
    %v276 = vld [vmem:[#allocation8 + $0x168] sm:$0xff]
    %v277 = vld [vmem:[#allocation8 + $0x170] sm:$0xff]
    %v278 = vld [vmem:[#allocation8 + $0x178] sm:$0xff]
    %v279 = vld [vmem:[#allocation8 + $0x180] sm:$0xff]
    %v280 = vld [vmem:[#allocation8 + $0x188] sm:$0xff]
    %v281 = vld [vmem:[#allocation8 + $0x190] sm:$0xff]
    %v282 = vld [vmem:[#allocation8 + $0x198] sm:$0xff]
    %v283 = vld [vmem:[#allocation8 + $0x1a0] sm:$0xff]
    %v284 = vld [vmem:[#allocation8 + $0x1a8] sm:$0xff]
    %v285 = vld [vmem:[#allocation8 + $0x1b0] sm:$0xff]
    %v286 = vld [vmem:[#allocation8 + $0x1b8] sm:$0xff]
    %v287 = vld [vmem:[#allocation8 + $0x1c0] sm:$0xff]
    %v288 = vld [vmem:[#allocation8 + $0x1c8] sm:$0xff]
    %v289 = vld [vmem:[#allocation8 + $0x1d0] sm:$0xff]
    %v290 = vld [vmem:[#allocation8 + $0x1d8] sm:$0xff]
    %v291 = vld [vmem:[#allocation8 + $0x1e0] sm:$0xff]
    %v292 = vld [vmem:[#allocation8 + $0x1e8] sm:$0xff]
    %v293 = vld [vmem:[#allocation8 + $0x1f0] sm:$0xff]
    %v294 = vld [vmem:[#allocation8 + $0x1f8] sm:$0xff]
    %v295 = vld [vmem:[%s4] sm:$0x3]
    %v297 = vlaneseq
    %v298 = vshrl.u32 %v297, 7
    %v299 = vsub.s32 0, %v298
    %v300 = vrot.slane %v295, %v299
    %v301 = vlaneseq
    %v302 = vshrl.u32 %v301, 7
    %v303 = vsub.s32 1, %v302
    %v304 = vrot.slane %v295, %v303
    %v371 = vunpack.c.l.b16 %v231
    %v372 = vunpack.c.h.b16 %v231
    %v373 = vunpack.c.l.b16 %v232
    %v374 = vunpack.c.h.b16 %v232
    %v375 = vunpack.c.l.b16 %v233
    %v376 = vunpack.c.h.b16 %v233
    %v377 = vunpack.c.l.b16 %v234
    %v378 = vunpack.c.h.b16 %v234
    %v379 = vunpack.c.l.b16 %v235
    %v380 = vunpack.c.h.b16 %v235
    %v381 = vunpack.c.l.b16 %v236
    %v382 = vunpack.c.h.b16 %v236
    %v383 = vunpack.c.l.b16 %v237
    %v384 = vunpack.c.h.b16 %v237
    %v385 = vunpack.c.l.b16 %v238
    %v386 = vunpack.c.h.b16 %v238
    %v387 = vunpack.c.l.b16 %v239
    %v388 = vunpack.c.h.b16 %v239
    %v389 = vunpack.c.l.b16 %v240
    %v390 = vunpack.c.h.b16 %v240
    %v391 = vunpack.c.l.b16 %v241
    %v392 = vunpack.c.h.b16 %v241
    %v393 = vunpack.c.l.b16 %v242
    %v394 = vunpack.c.h.b16 %v242
    %v395 = vunpack.c.l.b16 %v243
    %v396 = vunpack.c.h.b16 %v243
    %v397 = vunpack.c.l.b16 %v244
    %v398 = vunpack.c.h.b16 %v244
    %v399 = vunpack.c.l.b16 %v245
    %v400 = vunpack.c.h.b16 %v245
    %v401 = vunpack.c.l.b16 %v246
    %v402 = vunpack.c.h.b16 %v246
    %v403 = vunpack.c.l.b16 %v247
    %v404 = vunpack.c.h.b16 %v247
    %v405 = vunpack.c.l.b16 %v248
    %v406 = vunpack.c.h.b16 %v248
    %v407 = vunpack.c.l.b16 %v249
    %v408 = vunpack.c.h.b16 %v249
    %v409 = vunpack.c.l.b16 %v250
    %v410 = vunpack.c.h.b16 %v250
    %v411 = vunpack.c.l.b16 %v251
    %v412 = vunpack.c.h.b16 %v251
    %v413 = vunpack.c.l.b16 %v252
    %v414 = vunpack.c.h.b16 %v252
    %v415 = vunpack.c.l.b16 %v253
    %v416 = vunpack.c.h.b16 %v253
    %v417 = vunpack.c.l.b16 %v254
    %v418 = vunpack.c.h.b16 %v254
    %v419 = vunpack.c.l.b16 %v255
    %v420 = vunpack.c.h.b16 %v255
    %v421 = vunpack.c.l.b16 %v256
    %v422 = vunpack.c.h.b16 %v256
    %v423 = vunpack.c.l.b16 %v257
    %v424 = vunpack.c.h.b16 %v257
    %v425 = vunpack.c.l.b16 %v258
    %v426 = vunpack.c.h.b16 %v258
    %v427 = vunpack.c.l.b16 %v259
    %v428 = vunpack.c.h.b16 %v259
    %v429 = vunpack.c.l.b16 %v260
    %v430 = vunpack.c.h.b16 %v260
    %v431 = vunpack.c.l.b16 %v261
    %v432 = vunpack.c.h.b16 %v261
    %v433 = vunpack.c.l.b16 %v262
    %v434 = vunpack.c.h.b16 %v262
    %v435 = vunpack.c.l.b16 %v263
    %v436 = vunpack.c.h.b16 %v263
    %v437 = vunpack.c.l.b16 %v264
    %v438 = vunpack.c.h.b16 %v264
    %v439 = vunpack.c.l.b16 %v265
    %v440 = vunpack.c.h.b16 %v265
    %v441 = vunpack.c.l.b16 %v266
    %v442 = vunpack.c.h.b16 %v266
    %v443 = vunpack.c.l.b16 %v267
    %v444 = vunpack.c.h.b16 %v267
    %v445 = vunpack.c.l.b16 %v268
    %v446 = vunpack.c.h.b16 %v268
    %v447 = vunpack.c.l.b16 %v269
    %v448 = vunpack.c.h.b16 %v269
    %v449 = vunpack.c.l.b16 %v270
    %v450 = vunpack.c.h.b16 %v270
    %v451 = vunpack.c.l.b16 %v271
    %v452 = vunpack.c.h.b16 %v271
    %v453 = vunpack.c.l.b16 %v272
    %v454 = vunpack.c.h.b16 %v272
    %v455 = vunpack.c.l.b16 %v273
    %v456 = vunpack.c.h.b16 %v273
    %v457 = vunpack.c.l.b16 %v274
    %v458 = vunpack.c.h.b16 %v274
    %v459 = vunpack.c.l.b16 %v275
    %v460 = vunpack.c.h.b16 %v275
    %v461 = vunpack.c.l.b16 %v276
    %v462 = vunpack.c.h.b16 %v276
    %v463 = vunpack.c.l.b16 %v277
    %v464 = vunpack.c.h.b16 %v277
    %v465 = vunpack.c.l.b16 %v278
    %v466 = vunpack.c.h.b16 %v278
    %v467 = vunpack.c.l.b16 %v279
    %v468 = vunpack.c.h.b16 %v279
    %v469 = vunpack.c.l.b16 %v280
    %v470 = vunpack.c.h.b16 %v280
    %v471 = vunpack.c.l.b16 %v281
    %v472 = vunpack.c.h.b16 %v281
    %v473 = vunpack.c.l.b16 %v282
    %v474 = vunpack.c.h.b16 %v282
    %v475 = vunpack.c.l.b16 %v283
    %v476 = vunpack.c.h.b16 %v283
    %v477 = vunpack.c.l.b16 %v284
    %v478 = vunpack.c.h.b16 %v284
    %v479 = vunpack.c.l.b16 %v285
    %v480 = vunpack.c.h.b16 %v285
    %v481 = vunpack.c.l.b16 %v286
    %v482 = vunpack.c.h.b16 %v286
    %v483 = vunpack.c.l.b16 %v287
    %v484 = vunpack.c.h.b16 %v287
    %v485 = vunpack.c.l.b16 %v288
    %v486 = vunpack.c.h.b16 %v288
    %v487 = vunpack.c.l.b16 %v289
    %v488 = vunpack.c.h.b16 %v289
    %v489 = vunpack.c.l.b16 %v290
    %v490 = vunpack.c.h.b16 %v290
    %v491 = vunpack.c.l.b16 %v291
    %v492 = vunpack.c.h.b16 %v291
    %v493 = vunpack.c.l.b16 %v292
    %v494 = vunpack.c.h.b16 %v292
    %v495 = vunpack.c.l.b16 %v293
    %v496 = vunpack.c.h.b16 %v293
    %v497 = vunpack.c.l.b16 %v294
    %v498 = vunpack.c.h.b16 %v294
    %v499 = vpack.c.b16 %v373, %v371
    %v500 = vpack.c.b16 %v374, %v372
    %v501 = vpack.c.b16 %v377, %v375
    %v502 = vpack.c.b16 %v378, %v376
    %v503 = vpack.c.b16 %v381, %v379
    %v504 = vpack.c.b16 %v382, %v380
    %v505 = vpack.c.b16 %v385, %v383
    %v506 = vpack.c.b16 %v386, %v384
    %v507 = vpack.c.b16 %v389, %v387
    %v508 = vpack.c.b16 %v390, %v388
    %v509 = vpack.c.b16 %v393, %v391
    %v510 = vpack.c.b16 %v394, %v392
    %v511 = vpack.c.b16 %v397, %v395
    %v512 = vpack.c.b16 %v398, %v396
    %v513 = vpack.c.b16 %v401, %v399
    %v514 = vpack.c.b16 %v402, %v400
    %v515 = vpack.c.b16 %v405, %v403
    %v516 = vpack.c.b16 %v406, %v404
    %v517 = vpack.c.b16 %v409, %v407
    %v518 = vpack.c.b16 %v410, %v408
    %v519 = vpack.c.b16 %v413, %v411
    %v520 = vpack.c.b16 %v414, %v412
    %v521 = vpack.c.b16 %v417, %v415
    %v522 = vpack.c.b16 %v418, %v416
    %v523 = vpack.c.b16 %v421, %v419
    %v524 = vpack.c.b16 %v422, %v420
    %v525 = vpack.c.b16 %v425, %v423
    %v526 = vpack.c.b16 %v426, %v424
    %v527 = vpack.c.b16 %v429, %v427
    %v528 = vpack.c.b16 %v430, %v428
    %v529 = vpack.c.b16 %v433, %v431
    %v530 = vpack.c.b16 %v434, %v432
    %v531 = vpack.c.b16 %v437, %v435
    %v532 = vpack.c.b16 %v438, %v436
    %v533 = vpack.c.b16 %v441, %v439
    %v534 = vpack.c.b16 %v442, %v440
    %v535 = vpack.c.b16 %v445, %v443
    %v536 = vpack.c.b16 %v446, %v444
    %v537 = vpack.c.b16 %v449, %v447
    %v538 = vpack.c.b16 %v450, %v448
    %v539 = vpack.c.b16 %v453, %v451
    %v540 = vpack.c.b16 %v454, %v452
    %v541 = vpack.c.b16 %v457, %v455
    %v542 = vpack.c.b16 %v458, %v456
    %v543 = vpack.c.b16 %v461, %v459
    %v544 = vpack.c.b16 %v462, %v460
    %v545 = vpack.c.b16 %v465, %v463
    %v546 = vpack.c.b16 %v466, %v464
    %v547 = vpack.c.b16 %v469, %v467
    %v548 = vpack.c.b16 %v470, %v468
    %v549 = vpack.c.b16 %v473, %v471
    %v550 = vpack.c.b16 %v474, %v472
    %v551 = vpack.c.b16 %v477, %v475
    %v552 = vpack.c.b16 %v478, %v476
    %v553 = vpack.c.b16 %v481, %v479
    %v554 = vpack.c.b16 %v482, %v480
    %v555 = vpack.c.b16 %v485, %v483
    %v556 = vpack.c.b16 %v486, %v484
    %v557 = vpack.c.b16 %v489, %v487
    %v558 = vpack.c.b16 %v490, %v488
    %v559 = vpack.c.b16 %v493, %v491
    %v560 = vpack.c.b16 %v494, %v492
    %v561 = vpack.c.b16 %v497, %v495
    %v562 = vpack.c.b16 %v498, %v496
    %627 = vmatprep.subr.bf16.mxu0 %v500
    %628 = vmatpush1.bf16.msra.mxu0 %v499
    %629 = vmatprep.subr.bf16.mxu0 %v502
    %630 = vmatpush1.bf16.msra.mxu0 %v501
    %631 = vmatprep.subr.bf16.mxu0 %v504
    %632 = vmatpush1.bf16.msra.mxu0 %v503
    %633 = vmatprep.subr.bf16.mxu0 %v506
    %634 = vmatpush1.bf16.msra.mxu0 %v505
    %635 = vmatprep.subr.bf16.mxu0 %v508
    %636 = vmatpush1.bf16.msra.mxu0 %v507
    %637 = vmatprep.subr.bf16.mxu0 %v510
    %638 = vmatpush1.bf16.msra.mxu0 %v509
    %639 = vmatprep.subr.bf16.mxu0 %v512
    %640 = vmatpush1.bf16.msra.mxu0 %v511
    %641 = vmatprep.subr.bf16.mxu0 %v514
    %642 = vmatpush1.bf16.msra.mxu0 %v513
    %643 = vmatprep.subr.bf16.mxu0 %v516
    %644 = vmatpush1.bf16.msra.mxu0 %v515
    %645 = vmatprep.subr.bf16.mxu0 %v518
    %646 = vmatpush1.bf16.msra.mxu0 %v517
    %647 = vmatprep.subr.bf16.mxu0 %v520
    %648 = vmatpush1.bf16.msra.mxu0 %v519
    %649 = vmatprep.subr.bf16.mxu0 %v522
    %650 = vmatpush1.bf16.msra.mxu0 %v521
    %651 = vmatprep.subr.bf16.mxu0 %v524
    %652 = vmatpush1.bf16.msra.mxu0 %v523
    %653 = vmatprep.subr.bf16.mxu0 %v526
    %654 = vmatpush1.bf16.msra.mxu0 %v525
    %655 = vmatprep.subr.bf16.mxu0 %v528
    %656 = vmatpush1.bf16.msra.mxu0 %v527
    %657 = vmatprep.subr.bf16.mxu0 %v530
    %658 = vmatpush1.bf16.msra.mxu0 %v529
    %659 = vmatprep.mubr.bf16.mxu0 %v228
    %660 = vmatmul.mubr.bf16.gmra.mrb[0].mxu0 %v227
    %v661 = vpop.f32.mrb[0].mxu0
    %v662 = vadd.f32 %v300, %v661
    %v663 = vpop.f32.mrb[0].mxu0
    %v664 = vadd.f32 %v304, %v663
    %v665 = vpop.f32.mrb[0].mxu0
    %v666 = vpop.f32.mrb[0].mxu0
    %667 = vdwg.mxu0
    %668 = vmatprep.subr.bf16.mxu0 %v532
    %669 = vmatpush1.bf16.msra.mxu0 %v531
    %670 = vmatprep.subr.bf16.mxu0 %v534
    %671 = vmatpush1.bf16.msra.mxu0 %v533
    %672 = vmatprep.subr.bf16.mxu0 %v536
    %673 = vmatpush1.bf16.msra.mxu0 %v535
    %674 = vmatprep.subr.bf16.mxu0 %v538
    %675 = vmatpush1.bf16.msra.mxu0 %v537
    %676 = vmatprep.subr.bf16.mxu0 %v540
    %677 = vmatpush1.bf16.msra.mxu0 %v539
    %678 = vmatprep.subr.bf16.mxu0 %v542
    %679 = vmatpush1.bf16.msra.mxu0 %v541
    %680 = vmatprep.subr.bf16.mxu0 %v544
    %681 = vmatpush1.bf16.msra.mxu0 %v543
    %682 = vmatprep.subr.bf16.mxu0 %v546
    %683 = vmatpush1.bf16.msra.mxu0 %v545
    %684 = vmatprep.subr.bf16.mxu0 %v548
    %685 = vmatpush1.bf16.msra.mxu0 %v547
    %686 = vmatprep.subr.bf16.mxu0 %v550
    %687 = vmatpush1.bf16.msra.mxu0 %v549
    %688 = vmatprep.subr.bf16.mxu0 %v552
    %689 = vmatpush1.bf16.msra.mxu0 %v551
    %690 = vmatprep.subr.bf16.mxu0 %v554
    %691 = vmatpush1.bf16.msra.mxu0 %v553
    %692 = vmatprep.subr.bf16.mxu0 %v556
    %693 = vmatpush1.bf16.msra.mxu0 %v555
    %694 = vmatprep.subr.bf16.mxu0 %v558
    %695 = vmatpush1.bf16.msra.mxu0 %v557
    %696 = vmatprep.subr.bf16.mxu0 %v560
    %697 = vmatpush1.bf16.msra.mxu0 %v559
    %698 = vmatprep.subr.bf16.mxu0 %v562
    %699 = vmatpush1.bf16.msra.mxu0 %v561
    %700 = vmatprep.mubr.bf16.mxu0 %v230
    %701 = vmatmul.mubr.bf16.gmra.mrb[0].mxu0 %v229
    %v702 = vpop.f32.mrb[0].mxu0
    %v703 = vadd.f32 %v662, %v702
    %v704 = vpop.f32.mrb[0].mxu0
    %v705 = vadd.f32 %v664, %v704
    %v706 = vpop.f32.mrb[0].mxu0
    %v707 = vpop.f32.mrb[0].mxu0
    %708 = vdwg.mxu0
    %v709 = vmax.f32 %v703, 0.0
    %v710 = vmax.f32 %v705, 0.0
    %v711 = vpack.c.bf16 %v709, %v709
    %v712 = vpack.c.bf16 %v710, %v710
    %v713 = vld [vmem:[#allocation9] sm:$0xff]
    %v714 = vld [vmem:[#allocation9 + $0x8] sm:$0xff]
    %v715 = vld [vmem:[#allocation9 + $0x10] sm:$0xff]
    %v716 = vld [vmem:[#allocation9 + $0x18] sm:$0xff]
    %v717 = vld [vmem:[#allocation9 + $0x20] sm:$0xff]
    %v718 = vld [vmem:[#allocation9 + $0x28] sm:$0xff]
    %v719 = vld [vmem:[#allocation9 + $0x30] sm:$0xff]
    %v720 = vld [vmem:[#allocation9 + $0x38] sm:$0xff]
    %v721 = vld [vmem:[#allocation9 + $0x40] sm:$0xff]
    %v722 = vld [vmem:[#allocation9 + $0x48] sm:$0xff]
    %v723 = vld [vmem:[#allocation9 + $0x50] sm:$0xff]
    %v724 = vld [vmem:[#allocation9 + $0x58] sm:$0xff]
    %v725 = vld [vmem:[#allocation9 + $0x60] sm:$0xff]
    %v726 = vld [vmem:[#allocation9 + $0x68] sm:$0xff]
    %v727 = vld [vmem:[#allocation9 + $0x70] sm:$0xff]
    %v728 = vld [vmem:[#allocation9 + $0x78] sm:$0xff]
    %v729 = vld [vmem:[#allocation9 + $0x80] sm:$0xff]
    %v730 = vld [vmem:[#allocation9 + $0x88] sm:$0xff]
    %v731 = vld [vmem:[#allocation9 + $0x90] sm:$0xff]
    %v732 = vld [vmem:[#allocation9 + $0x98] sm:$0xff]
    %v733 = vld [vmem:[#allocation9 + $0xa0] sm:$0xff]
    %v734 = vld [vmem:[#allocation9 + $0xa8] sm:$0xff]
    %v735 = vld [vmem:[#allocation9 + $0xb0] sm:$0xff]
    %v736 = vld [vmem:[#allocation9 + $0xb8] sm:$0xff]
    %v737 = vld [vmem:[#allocation9 + $0xc0] sm:$0xff]
    %v738 = vld [vmem:[#allocation9 + $0xc8] sm:$0xff]
    %v739 = vld [vmem:[#allocation9 + $0xd0] sm:$0xff]
    %v740 = vld [vmem:[#allocation9 + $0xd8] sm:$0xff]
    %v741 = vld [vmem:[#allocation9 + $0xe0] sm:$0xff]
    %v742 = vld [vmem:[#allocation9 + $0xe8] sm:$0xff]
    %v743 = vld [vmem:[#allocation9 + $0xf0] sm:$0xff]
    %v744 = vld [vmem:[#allocation9 + $0xf8] sm:$0xff]
    %v745 = vld [vmem:[%s6] sm:$0x3]
    %v747 = vlaneseq
    %v748 = vshrl.u32 %v747, 7
    %v749 = vsub.s32 0, %v748
    %v750 = vrot.slane %v745, %v749
    %v751 = vlaneseq
    %v752 = vshrl.u32 %v751, 7
    %v753 = vsub.s32 1, %v752
    %v754 = vrot.slane %v745, %v753
    %v789 = vunpack.c.l.b16 %v713
    %v790 = vunpack.c.h.b16 %v713
    %v791 = vunpack.c.l.b16 %v714
    %v792 = vunpack.c.h.b16 %v714
    %v793 = vunpack.c.l.b16 %v715
    %v794 = vunpack.c.h.b16 %v715
    %v795 = vunpack.c.l.b16 %v716
    %v796 = vunpack.c.h.b16 %v716
    %v797 = vunpack.c.l.b16 %v717
    %v798 = vunpack.c.h.b16 %v717
    %v799 = vunpack.c.l.b16 %v718
    %v800 = vunpack.c.h.b16 %v718
    %v801 = vunpack.c.l.b16 %v719
    %v802 = vunpack.c.h.b16 %v719
    %v803 = vunpack.c.l.b16 %v720
    %v804 = vunpack.c.h.b16 %v720
    %v805 = vunpack.c.l.b16 %v721
    %v806 = vunpack.c.h.b16 %v721
    %v807 = vunpack.c.l.b16 %v722
    %v808 = vunpack.c.h.b16 %v722
    %v809 = vunpack.c.l.b16 %v723
    %v810 = vunpack.c.h.b16 %v723
    %v811 = vunpack.c.l.b16 %v724
    %v812 = vunpack.c.h.b16 %v724
    %v813 = vunpack.c.l.b16 %v725
    %v814 = vunpack.c.h.b16 %v725
    %v815 = vunpack.c.l.b16 %v726
    %v816 = vunpack.c.h.b16 %v726
    %v817 = vunpack.c.l.b16 %v727
    %v818 = vunpack.c.h.b16 %v727
    %v819 = vunpack.c.l.b16 %v728
    %v820 = vunpack.c.h.b16 %v728
    %v821 = vunpack.c.l.b16 %v729
    %v822 = vunpack.c.h.b16 %v729
    %v823 = vunpack.c.l.b16 %v730
    %v824 = vunpack.c.h.b16 %v730
    %v825 = vunpack.c.l.b16 %v731
    %v826 = vunpack.c.h.b16 %v731
    %v827 = vunpack.c.l.b16 %v732
    %v828 = vunpack.c.h.b16 %v732
    %v829 = vunpack.c.l.b16 %v733
    %v830 = vunpack.c.h.b16 %v733
    %v831 = vunpack.c.l.b16 %v734
    %v832 = vunpack.c.h.b16 %v734
    %v833 = vunpack.c.l.b16 %v735
    %v834 = vunpack.c.h.b16 %v735
    %v835 = vunpack.c.l.b16 %v736
    %v836 = vunpack.c.h.b16 %v736
    %v837 = vunpack.c.l.b16 %v737
    %v838 = vunpack.c.h.b16 %v737
    %v839 = vunpack.c.l.b16 %v738
    %v840 = vunpack.c.h.b16 %v738
    %v841 = vunpack.c.l.b16 %v739
    %v842 = vunpack.c.h.b16 %v739
    %v843 = vunpack.c.l.b16 %v740
    %v844 = vunpack.c.h.b16 %v740
    %v845 = vunpack.c.l.b16 %v741
    %v846 = vunpack.c.h.b16 %v741
    %v847 = vunpack.c.l.b16 %v742
    %v848 = vunpack.c.h.b16 %v742
    %v849 = vunpack.c.l.b16 %v743
    %v850 = vunpack.c.h.b16 %v743
    %v851 = vunpack.c.l.b16 %v744
    %v852 = vunpack.c.h.b16 %v744
    %v853 = vpack.c.b16 %v791, %v789
    %v854 = vpack.c.b16 %v792, %v790
    %v855 = vpack.c.b16 %v795, %v793
    %v856 = vpack.c.b16 %v796, %v794
    %v857 = vpack.c.b16 %v799, %v797
    %v858 = vpack.c.b16 %v800, %v798
    %v859 = vpack.c.b16 %v803, %v801
    %v860 = vpack.c.b16 %v804, %v802
    %v861 = vpack.c.b16 %v807, %v805
    %v862 = vpack.c.b16 %v808, %v806
    %v863 = vpack.c.b16 %v811, %v809
    %v864 = vpack.c.b16 %v812, %v810
    %v865 = vpack.c.b16 %v815, %v813
    %v866 = vpack.c.b16 %v816, %v814
    %v867 = vpack.c.b16 %v819, %v817
    %v868 = vpack.c.b16 %v820, %v818
    %v869 = vpack.c.b16 %v823, %v821
    %v870 = vpack.c.b16 %v824, %v822
    %v871 = vpack.c.b16 %v827, %v825
    %v872 = vpack.c.b16 %v828, %v826
    %v873 = vpack.c.b16 %v831, %v829
    %v874 = vpack.c.b16 %v832, %v830
    %v875 = vpack.c.b16 %v835, %v833
    %v876 = vpack.c.b16 %v836, %v834
    %v877 = vpack.c.b16 %v839, %v837
    %v878 = vpack.c.b16 %v840, %v838
    %v879 = vpack.c.b16 %v843, %v841
    %v880 = vpack.c.b16 %v844, %v842
    %v881 = vpack.c.b16 %v847, %v845
    %v882 = vpack.c.b16 %v848, %v846
    %v883 = vpack.c.b16 %v851, %v849
    %v884 = vpack.c.b16 %v852, %v850
    %917 = vmatprep.subr.bf16.mxu0 %v854
    %918 = vmatpush1.bf16.msra.mxu0 %v853
    %919 = vmatprep.subr.bf16.mxu0 %v856
    %920 = vmatpush1.bf16.msra.mxu0 %v855
    %921 = vmatprep.subr.bf16.mxu0 %v858
    %922 = vmatpush1.bf16.msra.mxu0 %v857
    %923 = vmatprep.subr.bf16.mxu0 %v860
    %924 = vmatpush1.bf16.msra.mxu0 %v859
    %925 = vmatprep.subr.bf16.mxu0 %v862
    %926 = vmatpush1.bf16.msra.mxu0 %v861
    %927 = vmatprep.subr.bf16.mxu0 %v864
    %928 = vmatpush1.bf16.msra.mxu0 %v863
    %929 = vmatprep.subr.bf16.mxu0 %v866
    %930 = vmatpush1.bf16.msra.mxu0 %v865
    %931 = vmatprep.subr.bf16.mxu0 %v868
    %932 = vmatpush1.bf16.msra.mxu0 %v867
    %933 = vmatprep.subr.bf16.mxu0 %v870
    %934 = vmatpush1.bf16.msra.mxu0 %v869
    %935 = vmatprep.subr.bf16.mxu0 %v872
    %936 = vmatpush1.bf16.msra.mxu0 %v871
    %937 = vmatprep.subr.bf16.mxu0 %v874
    %938 = vmatpush1.bf16.msra.mxu0 %v873
    %939 = vmatprep.subr.bf16.mxu0 %v876
    %940 = vmatpush1.bf16.msra.mxu0 %v875
    %941 = vmatprep.subr.bf16.mxu0 %v878
    %942 = vmatpush1.bf16.msra.mxu0 %v877
    %943 = vmatprep.subr.bf16.mxu0 %v880
    %944 = vmatpush1.bf16.msra.mxu0 %v879
    %945 = vmatprep.subr.bf16.mxu0 %v882
    %946 = vmatpush1.bf16.msra.mxu0 %v881
    %947 = vmatprep.subr.bf16.mxu0 %v884
    %948 = vmatpush1.bf16.msra.mxu0 %v883
    %949 = vmatprep.mubr.bf16.mxu0 %v712
    %950 = vmatmul.mubr.bf16.gmra.mrb[0].mxu0 %v711
    %v951 = vpop.f32.mrb[0].mxu0
    %v952 = vadd.f32 %v750, %v951
    %v953 = vpop.f32.mrb[0].mxu0
    %v954 = vadd.f32 %v754, %v953
    %v955 = vpop.f32.mrb[0].mxu0
    %v956 = vpop.f32.mrb[0].mxu0
    %957 = vdwg.mxu0
    %v958 = vmax.f32 %v952, 0.0
    %v959 = vmax.f32 %v954, 0.0
    %v960 = vld [vmem:[%s7] sm:$0xff]
    %v961 = vpack.c.bf16 %v958, %v958
    %v962 = vpack.c.bf16 %v959, %v959
    %v963 = vld [vmem:[#allocation2] sm:$0x1]
    %v965 = vlaneseq
    %v966 = vshrl.u32 %v965, 7
    %v967 = vsub.s32 0, %v966
    %v968 = vrot.slane %v963, %v967
    %969 = vset.pattern.permute.xlu0 0
    %970 = vperm.xlu0 %969, %v968
    %v971 = vpop.permute.xlu0 %970
    %v974 = vunpack.c.l.b16 %v960
    %v975 = vunpack.c.h.b16 %v960
    %v976 = vpack.c.b16 %v974, %v974
    %v977 = vpack.c.b16 %v975, %v975
    %980 = vmatprep.subr.bf16.mxu0 %v962
    %981 = vmatpush1.bf16.xpose.msra.mxu0 %v961
    %982 = vmatprep.subr.bf16.mxu0 0
    %983 = vmatpush1.bf16.xpose.msra.mxu0 0
    %984 = vmatprep.subr.bf16.mxu0 0
    %985 = vmatpush1.bf16.xpose.msra.mxu0 0
    %986 = vmatprep.subr.bf16.mxu0 0
    %987 = vmatpush1.bf16.xpose.msra.mxu0 0
    %988 = vmatprep.subr.bf16.mxu0 0
    %989 = vmatpush1.bf16.xpose.msra.mxu0 0
    %990 = vmatprep.subr.bf16.mxu0 0
    %991 = vmatpush1.bf16.xpose.msra.mxu0 0
    %992 = vmatprep.subr.bf16.mxu0 0
    %993 = vmatpush1.bf16.xpose.msra.mxu0 0
    %994 = vmatprep.subr.bf16.mxu0 0
    %995 = vmatpush1.bf16.xpose.msra.mxu0 0
    %996 = vmatprep.subr.bf16.mxu0 0
    %997 = vmatpush1.bf16.xpose.msra.mxu0 0
    %998 = vmatprep.subr.bf16.mxu0 0
    %999 = vmatpush1.bf16.xpose.msra.mxu0 0
    %1000 = vmatprep.subr.bf16.mxu0 0
    %1001 = vmatpush1.bf16.xpose.msra.mxu0 0
    %1002 = vmatprep.subr.bf16.mxu0 0
    %1003 = vmatpush1.bf16.xpose.msra.mxu0 0
    %1004 = vmatprep.subr.bf16.mxu0 0
    %1005 = vmatpush1.bf16.xpose.msra.mxu0 0
    %1006 = vmatprep.subr.bf16.mxu0 0
    %1007 = vmatpush1.bf16.xpose.msra.mxu0 0
    %1008 = vmatprep.subr.bf16.mxu0 0
    %1009 = vmatpush1.bf16.xpose.msra.mxu0 0
    %1010 = vmatprep.subr.bf16.mxu0 0
    %1011 = vmatpush1.bf16.xpose.msra.mxu0 0
    %1012 = vmatprep.mubr.bf16.mxu0 %v977
    %1013 = vmatmul.mubr.bf16.gmra.mrb[0].mxu0 %v976
    %v1014 = vpop.f32.mrb[0].mxu0
    %v1015 = vadd.f32 %v971, %v1014
    %v1016 = vpop.f32.mrb[0].mxu0
    %v1017 = vpop.f32.mrb[0].mxu0
    %v1018 = vpop.f32.mrb[0].mxu0
    %1019 = vdwg.mxu0
    %vm1020 = vcmask 64512
    %1021 = vst.msk [vmem:[#allocation11] sm:$0xff] %vm1020, %v1015
    // Predicated region
    $region54: #{tpu_custom_call.1} parent=1 // pred_check
      _
    $region55: #{tpu_custom_call.1} parent=1 // pred_check_branch
      %1023 = sbr.rel (0) target = $region57
    $region56: #{tpu_custom_call.1} parent=1 // pred_region
      %s1025 = ssub.s32 128, 128
      %1026 = vsyncadd [#allocation5], %s1025
      %s1028 = sshll.u32 [#allocation11], 4
      %s1029 = int_to_ptr.vmem [resolvable:$true] %s1028
      %1031 = dma.vmem_to_hbm [thread:$0]  %s1029, 128, %s9, [#allocation5]
    $region57: #{tpu_custom_call.1} parent=1 // pred_fallthru
      _
    // Predicated region
    $region58: #{tpu_custom_call.1} parent=1 // pred_check
      _
    $region59: #{tpu_custom_call.1} parent=1 // pred_check_branch
      %1033 = sbr.rel (0) target = $region61
    $region60: #{tpu_custom_call.1} parent=1 // pred_region
      %1034 = dma.done [#allocation5], 128
    $region61: #{tpu_custom_call.1} parent=1 // pred_fallthru
      _
    %1035 = vsyncpa [#allocation4], 1
    %1036 = vsyncpa [#allocation7], 1
    %1037 = vsyncpa [#allocation10], 1
    %1038 = vsyncpa [#allocation5], 1

</llo_original>
